<compile_context>
chip_gen: v6e
topology: v6e:2x2x1
jax: 0.10.0
libtpu: 0.0.40
codegen_flags: <defaults>
</compile_context>

<pallas_src>
import functools

import jax
import jax.numpy as jnp
from jax import lax
from jax.experimental import pallas as pl
from jax.experimental.pallas import tpu as pltpu

NUM_CLASSES = 17             # per hand (torch.split(..., 17, 1))
OUT_CH = 2 * NUM_CLASSES     # 34 logit channels from the segmentation model
_CONF_LANES = 128            # lane-padded per-tile confidence partials
_VPU_CIN_THRESHOLD = 32      # below this, skip the MXU and do an unrolled VPU MAC
_TILE_HW_HARD_CAP = 16384    # absolute max pixels per tile
_MIN_GRID_STEPS = 8          # keep >= ~8 grid steps so v7x's 2 TCs both get work


def _vmem_capacity_bytes():
    """Generation-aware VMEM capacity with a conservative (v7x) fallback."""
    try:
        return int(pltpu.get_tpu_info().vmem_capacity_bytes)
    except Exception:
        return 64 * 1024 * 1024


def _pick_tile_hw(hw, cin, x_itemsize, batch, vmem_cap):
    """HW tile from a VMEM byte budget + grid-occupancy cap (multiple of 128)."""
    if hw <= 128:
        return hw                               # tiny image: single full-extent block
    # Double-buffered bytes per pixel for one grid step: x in + logits + masks out.
    bytes_per_pixel = 2 * (cin * x_itemsize + OUT_CH * 4 + 2 * 4)
    budget = min(vmem_cap // 3, 40 << 20)       # leave headroom for scratch/temps
    t_budget = budget // bytes_per_pixel
    # Keep >= ~_MIN_GRID_STEPS steps in the (B, nt) grid (v7x megacore occupancy).
    tiles_needed = max(1, -(-_MIN_GRID_STEPS // max(1, batch)))
    t_occ = hw // tiles_needed
    t = min(t_budget, t_occ, hw, _TILE_HW_HARD_CAP)
    t -= t % 128
    return max(128, t)


# ---------------------------------------------------------------------------
# Pallas kernel: per-(batch, HW-tile) 1x1-conv head + per-pixel max/argmax
#                + per-tile confidence partials.  All stores are lane-dense.
# ---------------------------------------------------------------------------
def _gxy_kernel(x_ref, wt_ref, bt_ref, logits_ref, mask_ref, conf_ref, *, hw, tile):
    # x_ref:  (1, Cin, T) native dtype     wt_ref: (OUT_CH, Cin) same dtype as x
    # bt_ref: (OUT_CH, 1) f32
    # logits_ref: (1, OUT_CH, T) f32   mask_ref: (1, 2, T) i32   conf_ref: (1, 2, 128) f32
    x = x_ref[0]                                                   # (Cin, T)
    wt = wt_ref[...]                                               # (OUT_CH, Cin)
    bt = bt_ref[...]                                               # (OUT_CH, 1)
    cin, t = x.shape

    if cin >= _VPU_CIN_THRESHOLD:
        # Real backbone width: MXU with f32 accumulate (native for bf16/f32 inputs).
        logits = jnp.dot(wt, x, preferred_element_type=jnp.float32)
    else:
        # Tiny contraction: unrolled VPU multiply-accumulate (avoids a nearly
        # empty systolic array; overlaps with the stores that bound the kernel).
        xf = x.astype(jnp.float32)
        wf = wt.astype(jnp.float32)
        logits = jnp.zeros((OUT_CH, t), jnp.float32)
        for c in range(cin):
            logits = logits + wf[:, c:c + 1] * xf[c:c + 1, :]
    logits = logits + bt                                           # (OUT_CH, T) f32

    logits_ref[0] = logits.astype(logits_ref.dtype)                # lane-dense store

    # Ragged last tile: out-of-bounds output lanes are dropped by Pallas on
    # write-back, but the confidence *sum* must mask them explicitly.
    if hw % tile != 0:
        pos = pl.program_id(1) * tile + lax.broadcasted_iota(jnp.int32, (1, t), 1)
        lane_valid = pos < hw
    else:
        lane_valid = None

    cls_iota = lax.broadcasted_iota(jnp.int32, (NUM_CLASSES, t), 0)  # hoisted, shared

    def reduce_side(side):
        # side: (NUM_CLASSES, T).  Class max + first-max index along sublanes.
        m = jnp.max(side, axis=0, keepdims=True)                   # (1, T)
        arg = jnp.min(jnp.where(side == m, cls_iota, NUM_CLASSES),
                      axis=0, keepdims=True).astype(jnp.int32)     # (1, T)
        mv = m if lane_valid is None else jnp.where(lane_valid, m, 0.0)
        return arg, jnp.sum(mv)                                    # per-tile partial

    arg_l, conf_l = reduce_side(logits[:NUM_CLASSES, :])
    arg_r, conf_r = reduce_side(logits[NUM_CLASSES:OUT_CH, :])

    mask_ref[0] = jnp.concatenate([arg_l, arg_r], axis=0)          # (2, T) lane-dense
    conf_ref[0] = jnp.concatenate(
        [jnp.broadcast_to(conf_l, (1, _CONF_LANES)),
         jnp.broadcast_to(conf_r, (1, _CONF_LANES))],
        axis=0).astype(conf_ref.dtype)                             # (2, 128)


def _gxy_pallas(x, wt, bt):
    """x: (B, Cin, HW) native dtype; wt: (OUT_CH, Cin) same dtype; bt: (OUT_CH, 1) f32."""
    B, Cin, HW = x.shape
    x_item = jnp.dtype(x.dtype).itemsize
    vmem_cap = _vmem_capacity_bytes()
    tile = _pick_tile_hw(HW, Cin, x_item, B, vmem_cap)
    nt = pl.cdiv(HW, tile)

    est_vmem = (2 * Cin * tile * x_item                 # x (double-buffered)
                + 2 * OUT_CH * tile * 4                 # logits out
                + 2 * 2 * tile * 4                      # merged masks out
                + 2 * 2 * _CONF_LANES * 4               # conf partials out
                + 2 * (OUT_CH * Cin * x_item + OUT_CH * 4))   # resident weights/bias
    vmem_limit = int(min(2 * est_vmem + (8 << 20), (vmem_cap * 7) // 8))

    cost = pl.CostEstimate(
        flops=2 * B * HW * Cin * OUT_CH,
        transcendentals=0,
        bytes_accessed=(x.size * x_item + wt.size * x_item + bt.size * 4
                        + B * OUT_CH * HW * 4               # logits out
                        + B * 2 * HW * 4                    # masks out
                        + B * 2 * nt * _CONF_LANES * 4))    # conf partials out

    kernel = functools.partial(_gxy_kernel, hw=HW, tile=tile)

    return pl.pallas_call(
        kernel,
        out_shape=(
            jax.ShapeDtypeStruct((B, OUT_CH, HW), jnp.float32),           # logits (NCHW-flat)
            jax.ShapeDtypeStruct((B, 2, HW), jnp.int32),                  # masks [l, r]
            jax.ShapeDtypeStruct((B, 2, nt * _CONF_LANES), jnp.float32),  # conf partials [l, r]
        ),
        grid_spec=pltpu.PrefetchScalarGridSpec(
            num_scalar_prefetch=0,
            grid=(B, nt),
            in_specs=[
                pl.BlockSpec((1, Cin, tile), lambda b, t: (b, 0, t)),
                pl.BlockSpec((OUT_CH, Cin), lambda b, t: (0, 0)),
                pl.BlockSpec((OUT_CH, 1), lambda b, t: (0, 0)),
            ],
            out_specs=[
                pl.BlockSpec((1, OUT_CH, tile), lambda b, t: (b, 0, t)),
                pl.BlockSpec((1, 2, tile), lambda b, t: (b, 0, t)),
                pl.BlockSpec((1, 2, _CONF_LANES), lambda b, t: (b, 0, t)),
            ],
        ),
        compiler_params=pltpu.CompilerParams(
            dimension_semantics=("parallel", "parallel"),
            vmem_limit_bytes=vmem_limit),
        cost_estimate=cost,
    )(x, wt, bt)


# ---------------------------------------------------------------------------
# Plain-JAX glue reproducing G_XY.forward (no full-tensor transposes or casts)
# ---------------------------------------------------------------------------
def init_params(key, num_channels):
    kw, kb = jax.random.split(key)
    w = 0.1 * jax.random.normal(kw, (num_channels, OUT_CH), jnp.float32)
    b = 0.01 * jax.random.normal(kb, (1, OUT_CH), jnp.float32)
    return {"w": w, "b": b}


def g_xy_forward(img, params, uncertain=False):
    """img: (B, C, H, W) NCHW, like the PyTorch module."""
    B, C, H, W = img.shape
    HW = H * W
    x = img.reshape(B, C, HW)                               # pure reshape, native dtype
    wt = jnp.transpose(params["w"], (1, 0)).astype(img.dtype)   # (OUT_CH, Cin) — tiny
    bt = params["b"].reshape(OUT_CH, 1).astype(jnp.float32)

    logits_flat, masks_flat, conf_pad = _gxy_pallas(x, wt, bt)

    amodal_logits = logits_flat.reshape(B, OUT_CH, H, W)    # pure reshape
    amodal_logits_l = amodal_logits[:, :NUM_CLASSES]        # (B, 17, H, W)
    amodal_logits_r = amodal_logits[:, NUM_CLASSES:]        # (B, 17, H, W)
    segm_mask_l = masks_flat[:, 0, :].reshape(B, H, W)      # (B, H, W) int32
    segm_mask_r = masks_flat[:, 1, :].reshape(B, H, W)
    conf = conf_pad.reshape(B, 2, -1, _CONF_LANES)[:, :, :, 0].sum(axis=2)  # (B, 2)
    conf_l, conf_r = conf[:, 0], conf[:, 1]

    segm_dict = {}
    if uncertain:
        total_conf = conf_l + conf_r
        order = jnp.argsort(-total_conf)                    # descending
        segm_mask_l = segm_mask_l[order]
        segm_mask_r = segm_mask_r[order]
        segm_dict["order"] = order
    segm_dict["segm_mask_l"] = segm_mask_l
    segm_dict["segm_mask_r"] = segm_mask_r
    segm_dict["segm_logits"] = amodal_logits
    segm_dict["segm_logits_l"] = amodal_logits_l
    segm_dict["segm_logits_r"] = amodal_logits_r
    return {"segm_dict": segm_dict}


# Pure-JAX reference (for a correctness check of the kernel output).
def _reference(img, params):
    B, C, H, W = img.shape
    x = jnp.transpose(img, (0, 2, 3, 1)).astype(jnp.float32)
    logits = jnp.einsum("bhwc,ck->bhwk", x, params["w"]) + params["b"][0]
    l, r = logits[..., :NUM_CLASSES], logits[..., NUM_CLASSES:]
    return {
        "segm_logits": jnp.transpose(logits, (0, 3, 1, 2)),
        "segm_mask_l": jnp.argmax(l, axis=-1).astype(jnp.int32),
        "segm_mask_r": jnp.argmax(r, axis=-1).astype(jnp.int32),
        "conf_l": jnp.sum(jnp.max(l, axis=-1), axis=(1, 2)),
        "conf_r": jnp.sum(jnp.max(r, axis=-1), axis=(1, 2)),
    }


if __name__ == "__main__":
    key = jax.random.PRNGKey(0)
    k_img, k_par, k_img2 = jax.random.split(key, 3)

    B, C = 2, 4
    params = init_params(k_par, C)

    # Case 1: H*W a multiple of 128 (even tiles), uncertain ordering checked.
    img = jax.random.normal(k_img, (B, C, 16, 16), jnp.float32)
    out = g_xy_forward(img, params, uncertain=True)
    jax.block_until_ready(out)
    segm = out["segm_dict"]
    ref = _reference(img, params)

    assert segm["segm_logits"].shape == (B, OUT_CH, 16, 16)
    assert segm["segm_logits_l"].shape == (B, NUM_CLASSES, 16, 16)
    assert segm["segm_mask_l"].shape == (B, 16, 16)
    assert jnp.allclose(segm["segm_logits"], ref["segm_logits"], atol=1e-4, rtol=1e-4)
    inv = jnp.argsort(segm["order"])
    assert jnp.array_equal(segm["segm_mask_l"][inv], ref["segm_mask_l"])
    assert jnp.array_equal(segm["segm_mask_r"][inv], ref["segm_mask_r"])
    assert jnp.array_equal(segm["order"], jnp.argsort(-(ref["conf_l"] + ref["conf_r"])))

    # Case 2: H*W NOT a multiple of the tile (exercises the ragged last tile
    # with masked confidence partials and OOB-masked stores).
    img2 = jax.random.normal(k_img2, (B, C, 18, 18), jnp.float32)
    out2 = g_xy_forward(img2, params, uncertain=True)
    jax.block_until_ready(out2)
    segm2 = out2["segm_dict"]
    ref2 = _reference(img2, params)

    assert jnp.allclose(segm2["segm_logits"], ref2["segm_logits"], atol=1e-4, rtol=1e-4)
    inv2 = jnp.argsort(segm2["order"])
    assert jnp.array_equal(segm2["segm_mask_l"][inv2], ref2["segm_mask_l"])
    assert jnp.array_equal(segm2["segm_mask_r"][inv2], ref2["segm_mask_r"])
    assert jnp.array_equal(segm2["order"], jnp.argsort(-(ref2["conf_l"] + ref2["conf_r"])))

    print("KERNEL_OK")
</pallas_src>

<mosaic_0001>
module attributes {stable_mosaic.version = 11 : i64} {
  func.func @_gxy_kernel(%arg0: i32, %arg1: i32, %arg2: memref<1x4x128xf32, #tpu.memory_space<vmem>>, %arg3: memref<34x4xf32, #tpu.memory_space<vmem>>, %arg4: memref<34x1xf32, #tpu.memory_space<vmem>>, %arg5: memref<1x34x128xf32, #tpu.memory_space<vmem>>, %arg6: memref<1x2x128xi32, #tpu.memory_space<vmem>>, %arg7: memref<1x2x128xf32, #tpu.memory_space<vmem>>) attributes {dimension_semantics = [#tpu.dimension_semantics<parallel>, #tpu.dimension_semantics<parallel>], iteration_bounds = array<i64: 2, 2>, scalar_prefetch = 0 : i64, scratch_operands = 0 : i64, tpu.core_type = #tpu.core_type<tc>, window_params = [{transform_indices = @transform_0, window_bounds = array<i64: 1, 4, 128>}, {pipeline_mode = #tpu.pipeline_mode<synchronous>, transform_indices = @transform_1, window_bounds = array<i64: 34, 4>}, {pipeline_mode = #tpu.pipeline_mode<synchronous>, transform_indices = @transform_2, window_bounds = array<i64: 34, 1>}, {transform_indices = @transform_3, window_bounds = array<i64: 1, 34, 128>}, {transform_indices = @transform_4, window_bounds = array<i64: 1, 2, 128>}, {transform_indices = @transform_5, window_bounds = array<i64: 1, 2, 128>}]} {
    %c0 = arith.constant 0 : index
    %c0_0 = arith.constant 0 : index
    %c0_1 = arith.constant 0 : index
    %0 = vector.load %arg2[%c0, %c0_0, %c0_1] : memref<1x4x128xf32, #tpu.memory_space<vmem>>, vector<1x4x128xf32>
    %1 = vector.shape_cast %0 : vector<1x4x128xf32> to vector<4x128xf32>
    %c0_2 = arith.constant 0 : index
    %c0_3 = arith.constant 0 : index
    %2 = vector.load %arg3[%c0_2, %c0_3] : memref<34x4xf32, #tpu.memory_space<vmem>>, vector<34x4xf32>
    %c0_4 = arith.constant 0 : index
    %c0_5 = arith.constant 0 : index
    %3 = vector.load %arg4[%c0_4, %c0_5] : memref<34x1xf32, #tpu.memory_space<vmem>>, vector<34x1xf32>
    %cst = arith.constant 0.000000e+00 : f32
    %4 = vector.broadcast %cst : f32 to vector<34x128xf32>
    %5 = vector.extract_strided_slice %2 {offsets = [0, 0], sizes = [34, 1], strides = [1, 1]} : vector<34x4xf32> to vector<34x1xf32>
    %6 = vector.extract_strided_slice %1 {offsets = [0, 0], sizes = [1, 128], strides = [1, 1]} : vector<4x128xf32> to vector<1x128xf32>
    %7 = vector.broadcast %5 : vector<34x1xf32> to vector<34x128xf32>
    %8 = vector.broadcast %6 : vector<1x128xf32> to vector<34x128xf32>
    %9 = arith.mulf %7, %8 : vector<34x128xf32>
    %10 = arith.addf %4, %9 : vector<34x128xf32>
    %11 = vector.extract_strided_slice %2 {offsets = [0, 1], sizes = [34, 1], strides = [1, 1]} : vector<34x4xf32> to vector<34x1xf32>
    %12 = vector.extract_strided_slice %1 {offsets = [1, 0], sizes = [1, 128], strides = [1, 1]} : vector<4x128xf32> to vector<1x128xf32>
    %13 = vector.broadcast %11 : vector<34x1xf32> to vector<34x128xf32>
    %14 = vector.broadcast %12 : vector<1x128xf32> to vector<34x128xf32>
    %15 = arith.mulf %13, %14 : vector<34x128xf32>
    %16 = arith.addf %10, %15 : vector<34x128xf32>
    %17 = vector.extract_strided_slice %2 {offsets = [0, 2], sizes = [34, 1], strides = [1, 1]} : vector<34x4xf32> to vector<34x1xf32>
    %18 = vector.extract_strided_slice %1 {offsets = [2, 0], sizes = [1, 128], strides = [1, 1]} : vector<4x128xf32> to vector<1x128xf32>
    %19 = vector.broadcast %17 : vector<34x1xf32> to vector<34x128xf32>
    %20 = vector.broadcast %18 : vector<1x128xf32> to vector<34x128xf32>
    %21 = arith.mulf %19, %20 : vector<34x128xf32>
    %22 = arith.addf %16, %21 : vector<34x128xf32>
    %23 = vector.extract_strided_slice %2 {offsets = [0, 3], sizes = [34, 1], strides = [1, 1]} : vector<34x4xf32> to vector<34x1xf32>
    %24 = vector.extract_strided_slice %1 {offsets = [3, 0], sizes = [1, 128], strides = [1, 1]} : vector<4x128xf32> to vector<1x128xf32>
    %25 = vector.broadcast %23 : vector<34x1xf32> to vector<34x128xf32>
    %26 = vector.broadcast %24 : vector<1x128xf32> to vector<34x128xf32>
    %27 = arith.mulf %25, %26 : vector<34x128xf32>
    %28 = arith.addf %22, %27 : vector<34x128xf32>
    %29 = vector.broadcast %3 : vector<34x1xf32> to vector<34x128xf32>
    %30 = arith.addf %28, %29 : vector<34x128xf32>
    %c0_6 = arith.constant 0 : index
    %c0_7 = arith.constant 0 : index
    %c0_8 = arith.constant 0 : index
    %31 = vector.load %arg5[%c0_6, %c0_7, %c0_8] : memref<1x34x128xf32, #tpu.memory_space<vmem>>, vector<1x34x128xf32>
    %32 = vector.shape_cast %31 : vector<1x34x128xf32> to vector<34x128xf32>
    %33 = vector.shape_cast %30 : vector<34x128xf32> to vector<1x34x128xf32>
    tpu.vector_store %arg5[%c0_6, %c0_7, %c0_8], %33 {strides = array<i32>} : memref<1x34x128xf32, #tpu.memory_space<vmem>>, vector<1x34x128xf32>,
    %34 = tpu.iota {dimensions = array<i32: 0>} : vector<17x128xi32>
    %35 = vector.extract_strided_slice %30 {offsets = [0, 0], sizes = [17, 128], strides = [1, 1]} : vector<34x128xf32> to vector<17x128xf32>
    %cst_9 = arith.constant dense<0xFF800000> : vector<128xf32>
    %36 = vector.multi_reduction <maximumf>, %35, %cst_9 [0] : vector<17x128xf32> to vector<128xf32>
    %37 = vector.shape_cast %36 : vector<128xf32> to vector<1x128xf32>
    %38 = vector.broadcast %37 : vector<1x128xf32> to vector<17x128xf32>
    %39 = arith.cmpf oeq, %35, %38 : vector<17x128xf32>
    %c17_i32 = arith.constant 17 : i32
    %40 = vector.broadcast %c17_i32 : i32 to vector<17x128xi32>
    %41 = arith.select %39, %34, %40 : vector<17x128xi1>, vector<17x128xi32>
    %cst_10 = arith.constant dense<2147483647> : vector<128xi32>
    %42 = vector.multi_reduction <minsi>, %41, %cst_10 [0] : vector<17x128xi32> to vector<128xi32>
    %43 = vector.shape_cast %42 : vector<128xi32> to vector<1x128xi32>
    %44 = vector.shape_cast %37 : vector<1x128xf32> to vector<1x1x128xf32>
    %cst_11 = arith.constant dense<0.000000e+00> : vector<1xf32>
    %45 = vector.multi_reduction <add>, %44, %cst_11 [1, 2] : vector<1x1x128xf32> to vector<1xf32>
    %46 = vector.shape_cast %45 : vector<1xf32> to vector<1x1x1xf32>
    %47 = vector.extract %46[0, 0, 0] : f32 from vector<1x1x1xf32>
    %48 = vector.extract_strided_slice %30 {offsets = [17, 0], sizes = [17, 128], strides = [1, 1]} : vector<34x128xf32> to vector<17x128xf32>
    %cst_12 = arith.constant dense<0xFF800000> : vector<128xf32>
    %49 = vector.multi_reduction <maximumf>, %48, %cst_12 [0] : vector<17x128xf32> to vector<128xf32>
    %50 = vector.shape_cast %49 : vector<128xf32> to vector<1x128xf32>
    %51 = vector.broadcast %50 : vector<1x128xf32> to vector<17x128xf32>
    %52 = arith.cmpf oeq, %48, %51 : vector<17x128xf32>
    %c17_i32_13 = arith.constant 17 : i32
    %53 = vector.broadcast %c17_i32_13 : i32 to vector<17x128xi32>
    %54 = arith.select %52, %34, %53 : vector<17x128xi1>, vector<17x128xi32>
    %cst_14 = arith.constant dense<2147483647> : vector<128xi32>
    %55 = vector.multi_reduction <minsi>, %54, %cst_14 [0] : vector<17x128xi32> to vector<128xi32>
    %56 = vector.shape_cast %55 : vector<128xi32> to vector<1x128xi32>
    %57 = vector.shape_cast %50 : vector<1x128xf32> to vector<1x1x128xf32>
    %cst_15 = arith.constant dense<0.000000e+00> : vector<1xf32>
    %58 = vector.multi_reduction <add>, %57, %cst_15 [1, 2] : vector<1x1x128xf32> to vector<1xf32>
    %59 = vector.shape_cast %58 : vector<1xf32> to vector<1x1x1xf32>
    %60 = vector.extract %59[0, 0, 0] : f32 from vector<1x1x1xf32>
    %61 = tpu.concatenate %43, %56 in 0 : vector<1x128xi32>, vector<1x128xi32> -> vector<2x128xi32>
    %c0_16 = arith.constant 0 : index
    %c0_17 = arith.constant 0 : index
    %c0_18 = arith.constant 0 : index
    %62 = vector.load %arg6[%c0_16, %c0_17, %c0_18] : memref<1x2x128xi32, #tpu.memory_space<vmem>>, vector<1x2x128xi32>
    %63 = vector.shape_cast %62 : vector<1x2x128xi32> to vector<2x128xi32>
    %64 = vector.shape_cast %61 : vector<2x128xi32> to vector<1x2x128xi32>
    tpu.vector_store %arg6[%c0_16, %c0_17, %c0_18], %64 {strides = array<i32>} : memref<1x2x128xi32, #tpu.memory_space<vmem>>, vector<1x2x128xi32>,
    %65 = vector.broadcast %47 : f32 to vector<1x128xf32>
    %66 = vector.broadcast %60 : f32 to vector<1x128xf32>
    %67 = tpu.concatenate %65, %66 in 0 : vector<1x128xf32>, vector<1x128xf32> -> vector<2x128xf32>
    %c0_19 = arith.constant 0 : index
    %c0_20 = arith.constant 0 : index
    %c0_21 = arith.constant 0 : index
    %68 = vector.load %arg7[%c0_19, %c0_20, %c0_21] : memref<1x2x128xf32, #tpu.memory_space<vmem>>, vector<1x2x128xf32>
    %69 = vector.shape_cast %68 : vector<1x2x128xf32> to vector<2x128xf32>
    %70 = vector.shape_cast %67 : vector<2x128xf32> to vector<1x2x128xf32>
    tpu.vector_store %arg7[%c0_19, %c0_20, %c0_21], %70 {strides = array<i32>} : memref<1x2x128xf32, #tpu.memory_space<vmem>>, vector<1x2x128xf32>,
    return
  }
  func.func @transform_0(%arg0: i32, %arg1: i32) -> (i32, i32, i32) {
    %c0_i32 = arith.constant 0 : i32
    %c0_i32_0 = arith.constant 0 : i32
    return %arg0, %c0_i32, %arg1 : i32, i32, i32
  }
  func.func @transform_1(%arg0: i32, %arg1: i32) -> (i32, i32) {
    %c0_i32 = arith.constant 0 : i32
    %c0_i32_0 = arith.constant 0 : i32
    %c0_i32_1 = arith.constant 0 : i32
    return %c0_i32, %c0_i32_0 : i32, i32
  }
  func.func @transform_2(%arg0: i32, %arg1: i32) -> (i32, i32) {
    %c0_i32 = arith.constant 0 : i32
    %c0_i32_0 = arith.constant 0 : i32
    %c0_i32_1 = arith.constant 0 : i32
    return %c0_i32, %c0_i32_0 : i32, i32
  }
  func.func @transform_3(%arg0: i32, %arg1: i32) -> (i32, i32, i32) {
    %c0_i32 = arith.constant 0 : i32
    %c0_i32_0 = arith.constant 0 : i32
    return %arg0, %c0_i32, %arg1 : i32, i32, i32
  }
  func.func @transform_4(%arg0: i32, %arg1: i32) -> (i32, i32, i32) {
    %c0_i32 = arith.constant 0 : i32
    %c0_i32_0 = arith.constant 0 : i32
    return %arg0, %c0_i32, %arg1 : i32, i32, i32
  }
  func.func @transform_5(%arg0: i32, %arg1: i32) -> (i32, i32, i32) {
    %c0_i32 = arith.constant 0 : i32
    %c0_i32_0 = arith.constant 0 : i32
    return %arg0, %c0_i32, %arg1 : i32, i32, i32
  }
}

</mosaic_0001>

<llo_original>
// kernel: tpu_custom_call.1
$region0: #{tpu_custom_call.1}
  #allocation0 [shape = 'u32[]', space=smem, size = 0x4, offset = 0x4, fixed_abs, tag = 'smem constant byte address 0x4 - core index']
  #allocation1 [shape = 'u32[144,128]{1,0:T(1,128)}', space=vmem, size = 0x12000, scoped, tag = 'internal scratch']
  %s0 = inlined_call_operand.vmem [shape: f32[2,4,256], index: 0, kind: input, shape index: {}]
  %s1 = inlined_call_operand.vmem [shape: f32[34,4], index: 1, kind: input, shape index: {}]
  %s2 = inlined_call_operand.vmem [shape: f32[34,1], index: 2, kind: input, shape index: {}]
  %s3 = inlined_call_operand.vmem [shape: f32[2,34,256], index: 3, kind: output, shape index: {0}]
  %s4 = inlined_call_operand.hbm [shape: s32[2,2,256], index: 4, kind: output, shape index: {1}]
  %s5 = inlined_call_operand.hbm [shape: f32[2,2,256], index: 5, kind: output, shape index: {2}]
  %6 = xla_tuple %s3, %s4, %s5
  %s7 = sld [smem:[#allocation0]]
  $region95: #{tpu_custom_call.1} parent=0
    _
  %s9 = ssub.s32 1, %s7
  %s10 = scalar_select 0, %s9, %s7
  $region1: #{tpu_custom_call.1} parent=0
    #allocation2 [shape = 'u8[40960]{0}', space=vmem, size = 0xa000, scoped, tag = 'output window, operand 0']
    #allocation3 [shape = 'u8[2048]{0}', space=vmem, size = 0x800, scoped, tag = 'output window, operand 1']
    #allocation4 [shape = 's32[2]{0}', space=sflag, size = 0x8, scoped, tag = 'scoped memory for tpu_custom_call.1']
    #allocation5 [shape = 'u8[2048]{0}', space=vmem, size = 0x800, scoped, tag = 'output window, operand 2']
    #allocation6 [shape = 's32[2]{0}', space=sflag, size = 0x8, scoped, tag = 'scoped memory for tpu_custom_call.1']
    %11 = vsyncpa [#allocation4], 0
    %s12 = scalar_lea.sflag [#allocation4], 1
    %13 = vsyncpa %s12, 0
    %14 = vsyncpa [#allocation6], 0
    %s15 = scalar_lea.sflag [#allocation6], 1
    %16 = vsyncpa %s15, 0
    loop: start=0, step=1, limit=6
    $region2: #{tpu_custom_call.1} parent=1 // loop_pre_header
      _
    $region3: #{tpu_custom_call.1} parent=1 // loop_header
      %s18 = sphi 0, %s22
      %p19 = scmp.ge.s32.totalorder %s18, 6
      %s25 = sphi 0, %s37
      %s26 = sphi 0, %s33
      %s27 = sphi 0, %s25
      %s28 = sphi 0, %s26
      %s29 = sphi 0, %s27
      %s30 = sphi 0, %s28
      %s42 = sphi 0, %s44
      %s45 = sphi 0, %s42
      %s46 = sphi 0, %s45
      %s62 = sphi 0, %s46
      %s66 = sphi 0, %s66
      %s68 = sphi 0, %s66
      %s69 = sphi 0, %s68
      %s83 = sphi 0, %s69
      %s87 = sphi 0, %s87
      %s89 = sphi 0, %s87
      %s90 = sphi 0, %s89
      %s104 = sphi 0, %s90
      %s112 = sphi 0, %s114
      %s115 = sphi 0, %s112
      %s116 = sphi 0, %s115
      %s132 = sphi 0, %s116
      %s140 = sphi 0, %s142
      %s143 = sphi 0, %s140
      %s144 = sphi 0, %s143
      %s160 = sphi 0, %s144
      %s168 = sphi 0, %s170
      %s171 = sphi 0, %s168
      %s172 = sphi 0, %s171
      %s188 = sphi 0, %s172
    $region4: #{tpu_custom_call.1} parent=1 // loop_header_branch
      %21 = sbr.rel (%p19) target = $region8
    $region5: #{tpu_custom_call.1} parent=1 // loop_body
      %s23 = ssub.s32 %s18, 1
      %s24 = ssub.s32 %s18, 2
      %s31 = sadd.s32 1, %s26
      %p32 = scmp.ge.s32.totalorder %s31, 2
      %s33 = scalar_select %p32, 0, %s31
      %s34 = sadd.s32 1, %s25
      %s35 = scalar_select %p32, %s34, %s25
      %p36 = scmp.ge.s32.totalorder %s35, 2
      %s37 = scalar_select %p36, 0, %s35
      %s38 = ssub.s32 %s25, %s37
      %s39 = ssub.s32 %s26, %s33
      %s40 = sor.u32 %s38, %s39
      %p41 = scmp.eq.s32.totalorder %s40, 0
      %s43 = sadd.s32 %s42, 1
      %s44 = scalar_select %p41, %s42, %s43
      %p47 = pneg %p41
      %p48 = scmp.eq.s32.totalorder %s18, 3
      %p49 = por %p47, %p48
      %p50 = scmp.ne.s32.totalorder %s42, %s45
      %p51 = scmp.eq.s32.totalorder %s18, 0
      %p52 = por %p50, %p51
      %p53 = scmp.ne.s32.totalorder %s42, %s45
      %p54 = scmp.eq.s32.totalorder %s23, 3
      %p55 = por %p53, %p54
      %p56 = scmp.ne.s32.totalorder %s45, %s46
      %p57 = scmp.eq.s32.totalorder %s23, 0
      %p58 = por %p56, %p57
      %p59 = scmp.ne.s32.totalorder %s45, %s46
      %p60 = scmp.eq.s32.totalorder %s24, 3
      %p61 = por %p59, %p60
      %p63 = scmp.ne.s32.totalorder %s46, %s62
      %p64 = scmp.eq.s32.totalorder %s24, 0
      %p65 = por %p63, %p64
      %s67 = sadd.s32 %s66, 1
      %p70 = scmp.eq.s32.totalorder %s18, 3
      %p71 = scmp.ne.s32.totalorder %s66, %s68
      %p72 = scmp.eq.s32.totalorder %s18, 0
      %p73 = por %p71, %p72
      %p74 = scmp.ne.s32.totalorder %s66, %s68
      %p75 = scmp.eq.s32.totalorder %s23, 3
      %p76 = por %p74, %p75
      %p77 = scmp.ne.s32.totalorder %s68, %s69
      %p78 = scmp.eq.s32.totalorder %s23, 0
      %p79 = por %p77, %p78
      %p80 = scmp.ne.s32.totalorder %s68, %s69
      %p81 = scmp.eq.s32.totalorder %s24, 3
      %p82 = por %p80, %p81
      %p84 = scmp.ne.s32.totalorder %s69, %s83
      %p85 = scmp.eq.s32.totalorder %s24, 0
      %p86 = por %p84, %p85
      %s88 = sadd.s32 %s87, 1
      %p91 = scmp.eq.s32.totalorder %s18, 3
      %p92 = scmp.ne.s32.totalorder %s87, %s89
      %p93 = scmp.eq.s32.totalorder %s18, 0
      %p94 = por %p92, %p93
      %p95 = scmp.ne.s32.totalorder %s87, %s89
      %p96 = scmp.eq.s32.totalorder %s23, 3
      %p97 = por %p95, %p96
      %p98 = scmp.ne.s32.totalorder %s89, %s90
      %p99 = scmp.eq.s32.totalorder %s23, 0
      %p100 = por %p98, %p99
      %p101 = scmp.ne.s32.totalorder %s89, %s90
      %p102 = scmp.eq.s32.totalorder %s24, 3
      %p103 = por %p101, %p102
      %p105 = scmp.ne.s32.totalorder %s90, %s104
      %p106 = scmp.eq.s32.totalorder %s24, 0
      %p107 = por %p105, %p106
      %s108 = ssub.s32 %s25, %s37
      %s109 = ssub.s32 %s26, %s33
      %s110 = sor.u32 %s108, %s109
      %p111 = scmp.eq.s32.totalorder %s110, 0
      %s113 = sadd.s32 %s112, 1
      %s114 = scalar_select %p111, %s112, %s113
      %p117 = pneg %p111
      %p118 = scmp.eq.s32.totalorder %s18, 3
      %p119 = por %p117, %p118
      %p120 = scmp.ne.s32.totalorder %s112, %s115
      %p121 = scmp.eq.s32.totalorder %s18, 0
      %p122 = por %p120, %p121
      %p123 = scmp.ne.s32.totalorder %s112, %s115
      %p124 = scmp.eq.s32.totalorder %s23, 3
      %p125 = por %p123, %p124
      %p126 = scmp.ne.s32.totalorder %s115, %s116
      %p127 = scmp.eq.s32.totalorder %s23, 0
      %p128 = por %p126, %p127
      %p129 = scmp.ne.s32.totalorder %s115, %s116
      %p130 = scmp.eq.s32.totalorder %s24, 3
      %p131 = por %p129, %p130
      %p133 = scmp.ne.s32.totalorder %s116, %s132
      %p134 = scmp.eq.s32.totalorder %s24, 0
      %p135 = por %p133, %p134
      %s136 = ssub.s32 %s25, %s37
      %s137 = ssub.s32 %s26, %s33
      %s138 = sor.u32 %s136, %s137
      %p139 = scmp.eq.s32.totalorder %s138, 0
      %s141 = sadd.s32 %s140, 1
      %s142 = scalar_select %p139, %s140, %s141
      %p145 = pneg %p139
      %p146 = scmp.eq.s32.totalorder %s18, 3
      %p147 = por %p145, %p146
      %p148 = scmp.ne.s32.totalorder %s140, %s143
      %p149 = scmp.eq.s32.totalorder %s18, 0
      %p150 = por %p148, %p149
      %p151 = scmp.ne.s32.totalorder %s140, %s143
      %p152 = scmp.eq.s32.totalorder %s23, 3
      %p153 = por %p151, %p152
      %p154 = scmp.ne.s32.totalorder %s143, %s144
      %p155 = scmp.eq.s32.totalorder %s23, 0
      %p156 = por %p154, %p155
      %p157 = scmp.ne.s32.totalorder %s143, %s144
      %p158 = scmp.eq.s32.totalorder %s24, 3
      %p159 = por %p157, %p158
      %p161 = scmp.ne.s32.totalorder %s144, %s160
      %p162 = scmp.eq.s32.totalorder %s24, 0
      %p163 = por %p161, %p162
      %s164 = ssub.s32 %s25, %s37
      %s165 = ssub.s32 %s26, %s33
      %s166 = sor.u32 %s164, %s165
      %p167 = scmp.eq.s32.totalorder %s166, 0
      %s169 = sadd.s32 %s168, 1
      %s170 = scalar_select %p167, %s168, %s169
      %p173 = pneg %p167
      %p174 = scmp.eq.s32.totalorder %s18, 3
      %p175 = por %p173, %p174
      %p176 = scmp.ne.s32.totalorder %s168, %s171
      %p177 = scmp.eq.s32.totalorder %s18, 0
      %p178 = por %p176, %p177
      %p179 = scmp.ne.s32.totalorder %s168, %s171
      %p180 = scmp.eq.s32.totalorder %s23, 3
      %p181 = por %p179, %p180
      %p182 = scmp.ne.s32.totalorder %s171, %s172
      %p183 = scmp.eq.s32.totalorder %s23, 0
      %p184 = por %p182, %p183
      %p185 = scmp.ne.s32.totalorder %s171, %s172
      %p186 = scmp.eq.s32.totalorder %s24, 3
      %p187 = por %p185, %p186
      %p189 = scmp.ne.s32.totalorder %s172, %s188
      %p190 = scmp.eq.s32.totalorder %s24, 0
      %p191 = por %p189, %p190
      %p192 = scmp.le.s32.totalorder 1, %s18
      %p193 = scmp.lt.s32.totalorder %s18, 5
      %p194 = pnand %p192, %p193
      %p195 = pneg %p194
      // Predicated region
      $region9: #{tpu_custom_call.1} parent=5 // pred_check
        _
      $region10: #{tpu_custom_call.1} parent=5 // pred_check_branch
        %197 = sbr.rel (%p194) target = $region12
      $region11: #{tpu_custom_call.1} parent=5 // pred_region
        %s198 = ssub.s32 %s18, 1
        // Predicated region
        $region13: #{tpu_custom_call.1} parent=11 // pred_check
          %p199 = pneg %p79
        $region14: #{tpu_custom_call.1} parent=11 // pred_check_branch
          %201 = sbr.rel (%p199) target = $region16
        $region15: #{tpu_custom_call.1} parent=11 // pred_region
          _
        $region16: #{tpu_custom_call.1} parent=11 // pred_fallthru
          _
        // Predicated region
        $region17: #{tpu_custom_call.1} parent=11 // pred_check
          %p202 = pneg %p100
        $region18: #{tpu_custom_call.1} parent=11 // pred_check_branch
          %204 = sbr.rel (%p202) target = $region20
        $region19: #{tpu_custom_call.1} parent=11 // pred_region
          _
        $region20: #{tpu_custom_call.1} parent=11 // pred_fallthru
          _
      $region12: #{tpu_custom_call.1} parent=5 // pred_fallthru
        _
      %p205 = scmp.lt.s32.totalorder %s18, 4
      // Predicated region
      $region21: #{tpu_custom_call.1} parent=5 // pred_check
        %p206 = pneg %p205
      $region22: #{tpu_custom_call.1} parent=5 // pred_check_branch
        %208 = sbr.rel (%p206) target = $region24
      $region23: #{tpu_custom_call.1} parent=5 // pred_region
        // Predicated region
        $region25: #{tpu_custom_call.1} parent=23 // pred_check
          %p209 = pneg %p52
        $region26: #{tpu_custom_call.1} parent=23 // pred_check_branch
          %211 = sbr.rel (%p209) target = $region28
        $region27: #{tpu_custom_call.1} parent=23 // pred_region
          %p212 = scmp.lt.s32.totalorder %s25, 1
          %s213 = scalar_select %p212, %s25, 1
          %p214 = scmp.lt.s32.totalorder %s26, 1
          %s215 = scalar_select %p214, %s26, 1
          %s216 = smul.addr %s213, 2
          %s217 = sadd.s32 %s215, %s216
          %s218 = smul.addr %s217, 4
          %s219 = scalar_lea.vmem %s0, %s218
        $region28: #{tpu_custom_call.1} parent=23 // pred_fallthru
          _
      $region24: #{tpu_custom_call.1} parent=5 // pred_fallthru
        _
      %p220 = scmp.le.s32.totalorder 1, %s18
      %p221 = scmp.lt.s32.totalorder %s18, 5
      %p222 = pnand %p220, %p221
      %p223 = pneg %p222
      // Predicated region
      $region29: #{tpu_custom_call.1} parent=5 // pred_check
        _
      $region30: #{tpu_custom_call.1} parent=5 // pred_check_branch
        %225 = sbr.rel (%p222) target = $region32
      $region31: #{tpu_custom_call.1} parent=5 // pred_region
        %s226 = ssub.s32 %s18, 1
        %p227 = scmp.lt.s32.totalorder %s27, 1
        %s228 = scalar_select %p227, %s27, 1
        %p229 = scmp.lt.s32.totalorder %s28, 1
        %s230 = scalar_select %p229, %s28, 1
        %s231 = smul.addr %s228, 2
        %s232 = sadd.s32 %s230, %s231
        %s233 = smul.addr %s232, 4
        %s234 = scalar_lea.vmem %s0, %s233
        %p235 = pneg %p58
        %p236 = pneg %p55
        %p237 = pneg %p79
        %p238 = pneg %p76
        %p239 = pneg %p100
        %p240 = pneg %p97
        %p241 = pneg %p128
        %p242 = pneg %p125
        %s243 = sand.u32 %s115, 1
        %s244 = sand.u32 %s115, 1
        %s245 = smul.addr %s244, 40
        %s246 = scalar_lea.vmem [#allocation2], %s245
        %p247 = pneg %p156
        %p248 = pneg %p153
        %s249 = sand.u32 %s143, 1
        %s250 = scalar_lea.sflag [#allocation4], %s249
        %s251 = sand.u32 %s143, 1
        %s252 = smul.addr %s251, 2
        %s253 = scalar_lea.vmem [#allocation3], %s252
        %p254 = pneg %p184
        %p255 = pneg %p181
        %s256 = sand.u32 %s171, 1
        %s257 = scalar_lea.sflag [#allocation6], %s256
        %s258 = sand.u32 %s171, 1
        %s259 = smul.addr %s258, 2
        %s260 = scalar_lea.vmem [#allocation5], %s259
        %p261 = scmp.lt.s32.totalorder %s27, 1
        %s262 = scalar_select %p261, %s27, 1
        %p263 = scmp.lt.s32.totalorder %s28, 1
        %s264 = scalar_select %p263, %s28, 1
        %s265 = smul.addr %s262, 2
        %s266 = sadd.s32 %s264, %s265
        %s267 = smul.addr %s266, 4
        %s268 = scalar_lea.vmem %s0, %s267
        %v269 = vld [vmem:[%s268] sm:$0xf]
        %v270 = vld [vmem:[%s1] sm:$0xff]
        %v271 = vld [vmem:[%s1 + $0x8] sm:$0xff]
        %v272 = vld [vmem:[%s1 + $0x10] sm:$0xff]
        %v273 = vld [vmem:[%s1 + $0x18] sm:$0xff]
        %v274 = vld [vmem:[%s1 + $0x20] sm:$0x3]
        %v275 = vld [vmem:[%s2] sm:$0xff]
        %v276 = vld [vmem:[%s2 + $0x8] sm:$0xff]
        %v277 = vld [vmem:[%s2 + $0x10] sm:$0xff]
        %v278 = vld [vmem:[%s2 + $0x18] sm:$0xff]
        %v279 = vld [vmem:[%s2 + $0x20] sm:$0x3]
        %281 = vset.pattern.permute.xlu0 0
        %282 = vperm.xlu0 %281, %v270
        %v283 = vpop.permute.xlu0 %282
        %286 = vset.pattern.permute.xlu0 0
        %287 = vperm.xlu0 %286, %v271
        %v288 = vpop.permute.xlu0 %287
        %291 = vset.pattern.permute.xlu0 0
        %292 = vperm.xlu0 %291, %v272
        %v293 = vpop.permute.xlu0 %292
        %296 = vset.pattern.permute.xlu0 0
        %297 = vperm.xlu0 %296, %v273
        %v298 = vpop.permute.xlu0 %297
        %301 = vset.pattern.permute.xlu0 0
        %302 = vperm.xlu0 %301, %v274
        %v303 = vpop.permute.xlu0 %302
        %v305 = vlaneseq
        %v306 = vshrl.u32 %v305, 7
        %v307 = vsub.s32 0, %v306
        %v308 = vrot.slane %v269, %v307
        %v309 = vmul.f32 %v283, %v308
        %v310 = vmul.f32 %v288, %v308
        %v311 = vmul.f32 %v293, %v308
        %v312 = vmul.f32 %v298, %v308
        %v313 = vmul.f32 %v303, %v308
        %v314 = vadd.f32 %v309, 0.0
        %v315 = vadd.f32 %v310, 0.0
        %v316 = vadd.f32 %v311, 0.0
        %v317 = vadd.f32 %v312, 0.0
        %v318 = vadd.f32 %v313, 0.0
        %319 = vset.pattern.permute.xlu0 1
        %320 = vperm.xlu0 %319, %v270
        %v321 = vpop.permute.xlu0 %320
        %323 = vset.pattern.permute.xlu0 1
        %324 = vperm.xlu0 %323, %v271
        %v325 = vpop.permute.xlu0 %324
        %327 = vset.pattern.permute.xlu0 1
        %328 = vperm.xlu0 %327, %v272
        %v329 = vpop.permute.xlu0 %328
        %331 = vset.pattern.permute.xlu0 1
        %332 = vperm.xlu0 %331, %v273
        %v333 = vpop.permute.xlu0 %332
        %335 = vset.pattern.permute.xlu0 1
        %336 = vperm.xlu0 %335, %v274
        %v337 = vpop.permute.xlu0 %336
        %v339 = vlaneseq
        %v340 = vshrl.u32 %v339, 7
        %v341 = vsub.s32 1, %v340
        %v342 = vrot.slane %v269, %v341
        %v343 = vmul.f32 %v321, %v342
        %v344 = vmul.f32 %v325, %v342
        %v345 = vmul.f32 %v329, %v342
        %v346 = vmul.f32 %v333, %v342
        %v347 = vmul.f32 %v337, %v342
        %v348 = vadd.f32 %v314, %v343
        %v349 = vadd.f32 %v315, %v344
        %v350 = vadd.f32 %v316, %v345
        %v351 = vadd.f32 %v317, %v346
        %v352 = vadd.f32 %v318, %v347
        %353 = vset.pattern.permute.xlu0 2
        %354 = vperm.xlu0 %353, %v270
        %v355 = vpop.permute.xlu0 %354
        %357 = vset.pattern.permute.xlu0 2
        %358 = vperm.xlu0 %357, %v271
        %v359 = vpop.permute.xlu0 %358
        %361 = vset.pattern.permute.xlu0 2
        %362 = vperm.xlu0 %361, %v272
        %v363 = vpop.permute.xlu0 %362
        %365 = vset.pattern.permute.xlu0 2
        %366 = vperm.xlu0 %365, %v273
        %v367 = vpop.permute.xlu0 %366
        %369 = vset.pattern.permute.xlu0 2
        %370 = vperm.xlu0 %369, %v274
        %v371 = vpop.permute.xlu0 %370
        %v373 = vlaneseq
        %v374 = vshrl.u32 %v373, 7
        %v375 = vsub.s32 2, %v374
        %v376 = vrot.slane %v269, %v375
        %v377 = vmul.f32 %v355, %v376
        %v378 = vmul.f32 %v359, %v376
        %v379 = vmul.f32 %v363, %v376
        %v380 = vmul.f32 %v367, %v376
        %v381 = vmul.f32 %v371, %v376
        %v382 = vadd.f32 %v348, %v377
        %v383 = vadd.f32 %v349, %v378
        %v384 = vadd.f32 %v350, %v379
        %v385 = vadd.f32 %v351, %v380
        %v386 = vadd.f32 %v352, %v381
        %387 = vset.pattern.permute.xlu0 3
        %388 = vperm.xlu0 %387, %v270
        %v389 = vpop.permute.xlu0 %388
        %391 = vset.pattern.permute.xlu0 3
        %392 = vperm.xlu0 %391, %v271
        %v393 = vpop.permute.xlu0 %392
        %395 = vset.pattern.permute.xlu0 3
        %396 = vperm.xlu0 %395, %v272
        %v397 = vpop.permute.xlu0 %396
        %399 = vset.pattern.permute.xlu0 3
        %400 = vperm.xlu0 %399, %v273
        %v401 = vpop.permute.xlu0 %400
        %403 = vset.pattern.permute.xlu0 3
        %404 = vperm.xlu0 %403, %v274
        %v405 = vpop.permute.xlu0 %404
        %v407 = vlaneseq
        %v408 = vshrl.u32 %v407, 7
        %v409 = vsub.s32 3, %v408
        %v410 = vrot.slane %v269, %v409
        %v411 = vmul.f32 %v389, %v410
        %v412 = vmul.f32 %v393, %v410
        %v413 = vmul.f32 %v397, %v410
        %v414 = vmul.f32 %v401, %v410
        %v415 = vmul.f32 %v405, %v410
        %v416 = vadd.f32 %v382, %v411
        %v417 = vadd.f32 %v383, %v412
        %v418 = vadd.f32 %v384, %v413
        %v419 = vadd.f32 %v385, %v414
        %v420 = vadd.f32 %v386, %v415
        %422 = vset.pattern.permute.xlu0 0
        %423 = vperm.xlu0 %422, %v275
        %v424 = vpop.permute.xlu0 %423
        %427 = vset.pattern.permute.xlu0 0
        %428 = vperm.xlu0 %427, %v276
        %v429 = vpop.permute.xlu0 %428
        %432 = vset.pattern.permute.xlu0 0
        %433 = vperm.xlu0 %432, %v277
        %v434 = vpop.permute.xlu0 %433
        %437 = vset.pattern.permute.xlu0 0
        %438 = vperm.xlu0 %437, %v278
        %v439 = vpop.permute.xlu0 %438
        %442 = vset.pattern.permute.xlu0 0
        %443 = vperm.xlu0 %442, %v279
        %v444 = vpop.permute.xlu0 %443
        %v446 = vadd.f32 %v416, %v424
        %v447 = vadd.f32 %v417, %v429
        %v448 = vadd.f32 %v418, %v434
        %v449 = vadd.f32 %v419, %v439
        %v450 = vadd.f32 %v420, %v444
        %451 = vst [vmem:[%s246] sm:$0xff] %v446
        %452 = vst [vmem:[%s246 + $0x8] sm:$0xff] %v447
        %453 = vst [vmem:[%s246 + $0x10] sm:$0xff] %v448
        %454 = vst [vmem:[%s246 + $0x18] sm:$0xff] %v449
        %455 = vst [vmem:[%s246 + $0x20] sm:$0x3] %v450
        %v456 = vlaneseq
        %v457 = vshrl.u32 %v456, 7
        %v458 = vadd.s32 %v457, 8
        %v459 = vadd.s32 %v457, 16
        %vm460 = vcmask 1040384
        %v461 = vsel %vm460, %v448, -inf
        %v462 = vmax.f32 %v446, %v447
        %v463 = vmax.f32 %v462, %v461
        %v464 = vrot.slane %v463, 4
        %v465 = vmax.f32 %v463, %v464
        %v466 = vrot.slane %v465, 2
        %v467 = vmax.f32 %v465, %v466
        %v468 = vrot.slane %v467, 1
        %v469 = vmax.f32 %v467, %v468
        %vm470 = vcmp.eq.f32.partialorder %v446, %v469
        %vm471 = vcmp.eq.f32.partialorder %v447, %v469
        %vm472 = vcmp.eq.f32.partialorder %v448, %v469
        %v473 = vsel %vm470, %v457, 17
        %v474 = vsel %vm471, %v458, 17
        %v475 = vsel %vm472, %v459, 17
        %v476 = vsel %vm460, %v475, 2147483647
        %vm477 = vcmp.lt.s32.totalorder %v473, %v474
        %v478 = vsel %vm477, %v473, %v474
        %vm479 = vcmp.lt.s32.totalorder %v478, %v476
        %v480 = vsel %vm479, %v478, %v476
        %v481 = vrot.slane %v480, 4
        %vm482 = vcmp.lt.s32.totalorder %v480, %v481
        %v483 = vsel %vm482, %v480, %v481
        %v484 = vrot.slane %v483, 2
        %vm485 = vcmp.lt.s32.totalorder %v483, %v484
        %v486 = vsel %vm485, %v483, %v484
        %v487 = vrot.slane %v486, 1
        %vm488 = vcmp.lt.s32.totalorder %v486, %v487
        %v489 = vsel %vm488, %v486, %v487
        %v490 = vsel %vm460, %v469, 0.0
        %491 = vadd.xlane.f32.xlu0 %v490
        %v492 = vpop.xlane.xlu0 %491
        %v493 = vrot.slane %v492, 4
        %v494 = vadd.f32 %v492, %v493
        %v495 = vrot.slane %v494, 2
        %v496 = vadd.f32 %v494, %v495
        %v497 = vrot.slane %v496, 1
        %v498 = vadd.f32 %v496, %v497
        %s499 = vtos %v498
        %vm500 = vcmask 1047553
        %v501 = vsel %vm500, %v448, -inf
        %vm502 = vcmask 1041408
        %v503 = vsel %vm502, %v450, -inf
        %v504 = vmax.f32 %v501, %v449
        %v505 = vmax.f32 %v504, %v503
        %v506 = vrot.slane %v505, 4
        %v507 = vmax.f32 %v505, %v506
        %v508 = vrot.slane %v507, 2
        %v509 = vmax.f32 %v507, %v508
        %v510 = vrot.slane %v509, 1
        %v511 = vmax.f32 %v509, %v510
        %vm512 = vcmp.eq.f32.partialorder %v448, %v511
        %vm513 = vcmp.eq.f32.partialorder %v449, %v511
        %vm514 = vcmp.eq.f32.partialorder %v450, %v511
        %v515 = vrot.slane %v457, 7
        %v516 = vrot.slane %v458, 7
        %v517 = vsel %vm460, %v515, %v516
        %v518 = vrot.slane %v459, 7
        %v519 = vsel %vm460, %v516, %v518
        %v520 = vsel %vm512, %v515, 17
        %v521 = vsel %vm513, %v517, 17
        %v522 = vsel %vm514, %v519, 17
        %v523 = vsel %vm500, %v520, 2147483647
        %v524 = vsel %vm502, %v522, 2147483647
        %vm525 = vcmp.lt.s32.totalorder %v523, %v521
        %v526 = vsel %vm525, %v523, %v521
        %vm527 = vcmp.lt.s32.totalorder %v526, %v524
        %v528 = vsel %vm527, %v526, %v524
        %v529 = vrot.slane %v528, 4
        %vm530 = vcmp.lt.s32.totalorder %v528, %v529
        %v531 = vsel %vm530, %v528, %v529
        %v532 = vrot.slane %v531, 2
        %vm533 = vcmp.lt.s32.totalorder %v531, %v532
        %v534 = vsel %vm533, %v531, %v532
        %v535 = vrot.slane %v534, 1
        %vm536 = vcmp.lt.s32.totalorder %v534, %v535
        %v537 = vsel %vm536, %v534, %v535
        %v538 = vsel %vm460, %v511, 0.0
        %539 = vadd.xlane.f32.xlu0 %v538
        %v540 = vpop.xlane.xlu0 %539
        %v541 = vrot.slane %v540, 4
        %v542 = vadd.f32 %v540, %v541
        %v543 = vrot.slane %v542, 2
        %v544 = vadd.f32 %v542, %v543
        %v545 = vrot.slane %v544, 1
        %v546 = vadd.f32 %v544, %v545
        %s547 = vtos %v546
        %v548 = vsel %vm460, %v489, %v537
        %549 = vst [vmem:[%s253] sm:$0x3] %v548
        %v550 = vstv %s499
        %v551 = vstv %s547
        %v552 = vsel %vm460, %v550, %v551
        %553 = vst [vmem:[%s260] sm:$0x3] %v552
        %s554 = sand.u32 %s115, 1
        %s555 = sand.u32 %s115, 1
        %s556 = smul.addr %s555, 40
        %s557 = scalar_lea.vmem [#allocation2], %s556
        %s558 = sand.u32 %s143, 1
        %s559 = scalar_lea.sflag [#allocation4], %s558
        %s560 = sand.u32 %s143, 1
        %s561 = smul.addr %s560, 2
        %s562 = scalar_lea.vmem [#allocation3], %s561
        %s563 = sand.u32 %s171, 1
        %s564 = scalar_lea.sflag [#allocation6], %s563
        %s565 = sand.u32 %s171, 1
        %s566 = smul.addr %s565, 2
        %s567 = scalar_lea.vmem [#allocation5], %s566
        // Predicated region
        $region33: #{tpu_custom_call.1} parent=31 // pred_check
          %p568 = pneg %p125
        $region34: #{tpu_custom_call.1} parent=31 // pred_check_branch
          %570 = sbr.rel (%p568) target = $region36
        $region35: #{tpu_custom_call.1} parent=31 // pred_region
          %s571 = smul.addr %s27, 10
          %s572 = sadd.s32 %s28, %s571
          %s573 = smul.addr %s572, 8
          %s574 = scalar_lea.vmem %s3, %s573
          // Predicated region
          $region37: #{tpu_custom_call.1} parent=35 // pred_check
            _
          $region38: #{tpu_custom_call.1} parent=35 // pred_check_branch
            %576 = sbr.rel (0) target = $region40
          $region39: #{tpu_custom_call.1} parent=35 // pred_region
            // Predicated region
            $region41: #{tpu_custom_call.1} parent=39 // pred_check
              _
            $region42: #{tpu_custom_call.1} parent=39 // pred_check_branch
              %578 = sbr.rel (0) target = $region44
            $region43: #{tpu_custom_call.1} parent=39 // pred_region
              // Predicated region
              $region56: #{tpu_custom_call.1} parent=43 // pred_check
                _
              $region57: #{tpu_custom_call.1} parent=43 // pred_check_branch
                %602 = sbr.rel (0) target = $region59
              $region58: #{tpu_custom_call.1} parent=43 // pred_region
                loop: start=0, step=1, limit=1
                $region60: #{tpu_custom_call.1} parent=58 // loop_pre_header
                  _
                $region61: #{tpu_custom_call.1} parent=58 // loop_header
                  %s604 = sphi 0, %s608
                  %p605 = scmp.ge.s32.totalorder %s604, 1
                  %s609 = sphi %s557, %s557
                  %s610 = sphi %s574, %s574
                $region62: #{tpu_custom_call.1} parent=58 // loop_header_branch
                  %607 = sbr.rel (%p605) target = $region66
                $region63: #{tpu_custom_call.1} parent=58 // loop_body
                  %v611 = vld [vmem:[%s609] sm:$0xff]
                  %612 = vst [vmem:[%s610] sm:$0xff] %v611
                  %v613 = vld [vmem:[%s609 + $0x8] sm:$0xff]
                  %614 = vst [vmem:[%s610 + $0x10] sm:$0xff] %v613
                  %v615 = vld [vmem:[%s609 + $0x10] sm:$0xff]
                  %616 = vst [vmem:[%s610 + $0x20] sm:$0xff] %v615
                  %v617 = vld [vmem:[%s609 + $0x18] sm:$0xff]
                  %618 = vst [vmem:[%s610 + $0x30] sm:$0xff] %v617
                  %v619 = vld [vmem:[%s609 + $0x20] sm:$0xff]
                  %620 = vst [vmem:[%s610 + $0x40] sm:$0xff] %v619
                $region64: #{tpu_custom_call.1} parent=58 // loop_footer
                  %s608 = sadd.s32 1, %s604
                $region65: #{tpu_custom_call.1} parent=58 // loop_footer_branch
                  %603 = sbr.rel target = $region61
                $region66: #{tpu_custom_call.1} parent=58 // loop_exit
                  _
              $region59: #{tpu_custom_call.1} parent=43 // pred_fallthru
                _
              // Predicated region
              $region67: #{tpu_custom_call.1} parent=43 // pred_check
                _
              $region68: #{tpu_custom_call.1} parent=43 // pred_check_branch
                %622 = sbr.rel target = $region70
              $region69: #{tpu_custom_call.1} parent=43 // pred_region
                _
              $region70: #{tpu_custom_call.1} parent=43 // pred_fallthru
                _
            $region44: #{tpu_custom_call.1} parent=39 // pred_fallthru
              _
            // Predicated region
            $region45: #{tpu_custom_call.1} parent=39 // pred_check
              _
            $region46: #{tpu_custom_call.1} parent=39 // pred_check_branch
              %580 = sbr.rel target = $region48
            $region47: #{tpu_custom_call.1} parent=39 // pred_region
              %s582 = ssub.s32 256, 1
              loop: start=0, step=1, limit=1
              $region49: #{tpu_custom_call.1} parent=47 // loop_pre_header
                _
              $region50: #{tpu_custom_call.1} parent=47 // loop_header
                %s584 = sphi 0, %s588
                %p585 = scmp.ge.s32.totalorder %s584, 1
                %s589 = sphi %s557, %s557
                %s590 = sphi %s574, %s574
              $region51: #{tpu_custom_call.1} parent=47 // loop_header_branch
                %587 = sbr.rel (%p585) target = $region55
              $region52: #{tpu_custom_call.1} parent=47 // loop_body
                %v591 = vld [vmem:[%s589] sm:%s582]
                %592 = vst [vmem:[%s590] sm:%s582] %v591
                %v593 = vld [vmem:[%s589 + $0x8] sm:%s582]
                %594 = vst [vmem:[%s590 + $0x10] sm:%s582] %v593
                %v595 = vld [vmem:[%s589 + $0x10] sm:%s582]
                %596 = vst [vmem:[%s590 + $0x20] sm:%s582] %v595
                %v597 = vld [vmem:[%s589 + $0x18] sm:%s582]
                %598 = vst [vmem:[%s590 + $0x30] sm:%s582] %v597
                %v599 = vld [vmem:[%s589 + $0x20] sm:%s582]
                %600 = vst [vmem:[%s590 + $0x40] sm:%s582] %v599
              $region53: #{tpu_custom_call.1} parent=47 // loop_footer
                %s588 = sadd.s32 1, %s584
              $region54: #{tpu_custom_call.1} parent=47 // loop_footer_branch
                %583 = sbr.rel target = $region50
              $region55: #{tpu_custom_call.1} parent=47 // loop_exit
                _
            $region48: #{tpu_custom_call.1} parent=39 // pred_fallthru
              _
          $region40: #{tpu_custom_call.1} parent=35 // pred_fallthru
            _
          %623 = vnop
        $region36: #{tpu_custom_call.1} parent=31 // pred_fallthru
          _
        // Predicated region
        $region71: #{tpu_custom_call.1} parent=31 // pred_check
          %p624 = pneg %p153
        $region72: #{tpu_custom_call.1} parent=31 // pred_check_branch
          %626 = sbr.rel (%p624) target = $region74
        $region73: #{tpu_custom_call.1} parent=31 // pred_region
          %s628 = ssub.s32 32, 32
          %629 = vsyncadd %s559, %s628
          %s630 = smul.addr %s27, 2
          %s631 = sadd.s32 %s28, %s630
          %s632 = smul.addr %s631, 32
          %s633 = scalar_lea.hbm %s4, %s632
          %s635 = sshll.u32 %s562, 4
          %s636 = int_to_ptr.vmem [resolvable:$true] %s635
          %638 = dma.vmem_to_hbm [thread:$0]  %s636, 32, %s633, %s559
        $region74: #{tpu_custom_call.1} parent=31 // pred_fallthru
          _
        // Predicated region
        $region75: #{tpu_custom_call.1} parent=31 // pred_check
          %p639 = pneg %p181
        $region76: #{tpu_custom_call.1} parent=31 // pred_check_branch
          %641 = sbr.rel (%p639) target = $region78
        $region77: #{tpu_custom_call.1} parent=31 // pred_region
          %s643 = ssub.s32 32, 32
          %644 = vsyncadd %s564, %s643
          %s645 = smul.addr %s27, 2
          %s646 = sadd.s32 %s28, %s645
          %s647 = smul.addr %s646, 32
          %s648 = scalar_lea.hbm %s5, %s647
          %s650 = sshll.u32 %s567, 4
          %s651 = int_to_ptr.vmem [resolvable:$true] %s650
          %653 = dma.vmem_to_hbm [thread:$0]  %s651, 32, %s648, %s564
        $region78: #{tpu_custom_call.1} parent=31 // pred_fallthru
          _
      $region32: #{tpu_custom_call.1} parent=5 // pred_fallthru
        _
      %p654 = scmp.le.s32.totalorder 2, %s18
      // Predicated region
      $region79: #{tpu_custom_call.1} parent=5 // pred_check
        %p655 = pneg %p654
      $region80: #{tpu_custom_call.1} parent=5 // pred_check_branch
        %657 = sbr.rel (%p655) target = $region82
      $region81: #{tpu_custom_call.1} parent=5 // pred_region
        %s658 = ssub.s32 %s18, 2
        // Predicated region
        $region83: #{tpu_custom_call.1} parent=81 // pred_check
          %p659 = pneg %p131
        $region84: #{tpu_custom_call.1} parent=81 // pred_check_branch
          %661 = sbr.rel (%p659) target = $region86
        $region85: #{tpu_custom_call.1} parent=81 // pred_region
          %s662 = sand.u32 %s116, 1
          %s663 = sand.u32 %s116, 1
          %s664 = smul.addr %s663, 40
          %s665 = scalar_lea.vmem [#allocation2], %s664
        $region86: #{tpu_custom_call.1} parent=81 // pred_fallthru
          _
        // Predicated region
        $region87: #{tpu_custom_call.1} parent=81 // pred_check
          %p666 = pneg %p159
        $region88: #{tpu_custom_call.1} parent=81 // pred_check_branch
          %668 = sbr.rel (%p666) target = $region90
        $region89: #{tpu_custom_call.1} parent=81 // pred_region
          %s669 = sand.u32 %s144, 1
          %s670 = scalar_lea.sflag [#allocation4], %s669
          %s671 = sand.u32 %s144, 1
          %s672 = smul.addr %s671, 2
          %s673 = scalar_lea.vmem [#allocation3], %s672
          %674 = dma.done %s670, 32
        $region90: #{tpu_custom_call.1} parent=81 // pred_fallthru
          _
        // Predicated region
        $region91: #{tpu_custom_call.1} parent=81 // pred_check
          %p675 = pneg %p187
        $region92: #{tpu_custom_call.1} parent=81 // pred_check_branch
          %677 = sbr.rel (%p675) target = $region94
        $region93: #{tpu_custom_call.1} parent=81 // pred_region
          %s678 = sand.u32 %s172, 1
          %s679 = scalar_lea.sflag [#allocation6], %s678
          %s680 = sand.u32 %s172, 1
          %s681 = smul.addr %s680, 2
          %s682 = scalar_lea.vmem [#allocation5], %s681
          %683 = dma.done %s679, 32
        $region94: #{tpu_custom_call.1} parent=81 // pred_fallthru
          _
      $region82: #{tpu_custom_call.1} parent=5 // pred_fallthru
        _
    $region6: #{tpu_custom_call.1} parent=1 // loop_footer
      %s22 = sadd.s32 1, %s18
    $region7: #{tpu_custom_call.1} parent=1 // loop_footer_branch
      %17 = sbr.rel target = $region3
    $region8: #{tpu_custom_call.1} parent=1 // loop_exit
      _
    %684 = vsyncpa [#allocation4], 1
    %s685 = scalar_lea.sflag [#allocation4], 1
    %686 = vsyncpa %s685, 1
    %687 = vsyncpa [#allocation6], 1
    %s688 = scalar_lea.sflag [#allocation6], 1
    %689 = vsyncpa %s688, 1

</llo_original>
